<compile_context>
chip_gen: v7x
topology: tpu7x:2x2x1
jax: 0.10.0
libtpu: 0.0.40
codegen_flags: <defaults>
</compile_context>

<pallas_src>
import functools
import math

import jax
import jax.numpy as jnp
from jax import lax
from jax.experimental import pallas as pl
from jax.experimental.pallas import tpu as pltpu


def _shift_rows(v, d):
    """out[i] = v[(i + d) % P] along axis 0 (wrap rows are masked out by the caller)."""
    if d == 0:
        return v
    i = d % v.shape[0]
    if i == 0:
        return v
    return jnp.concatenate([v[i:], v[:i]], axis=0)


def _dfc_kernel(x_ref, w1f_ref, cpar_ref, o_ref, *, w2, dfc_k):
    f32 = jnp.float32
    pad = dfc_k // 2
    p = x_ref.shape[3]            # flattened pooled spatial size (sublane axis)
    tc2 = o_ref.shape[2]          # output-channel block (lane axis)

    # ---- 2x2 average pool: four pre-gathered bf16 (P, C1) slabs -> f32 adds + scale ----
    pooled = 0.25 * (x_ref[0, 0, 0].astype(f32) + x_ref[0, 0, 1].astype(f32)
                     + x_ref[0, 1, 0].astype(f32) + x_ref[0, 1, 1].astype(f32))

    # ---- 1x1 conv (BN1 scale folded into weights): one bf16 MXU matmul, f32 accum ----
    cp = cpar_ref[...]                                       # hoisted: single param load
    t = jnp.dot(pooled.astype(jnp.bfloat16), w1f_ref[...],
                preferred_element_type=f32)                  # (P, TC2)
    t = t + cp[2 * dfc_k:2 * dfc_k + 1, :]                   # + BN1 bias

    # in-register position indices (no lane-1 side input, no extra DMA stream)
    flat = lax.broadcasted_iota(jnp.int32, (p, tc2), 0)
    col = (flat & (w2 - 1)) if (w2 & (w2 - 1)) == 0 else (flat % w2)

    # ---- depthwise (1, dfc_k) conv along W (BN2 scale folded): shifted-adds ----
    y = cp[pad:pad + 1, :] * t
    for d in range(-pad, pad + 1):
        if d == 0:
            continue
        sh = _shift_rows(t, d)                               # sh[i] = t[i + d] (mod P)
        cond = (col >= -d) if d < 0 else (col < w2 - d)      # kills row-boundary + wrap taps
        y = y + cp[pad + d:pad + d + 1, :] * jnp.where(cond, sh, 0.0)
    y = y + cp[2 * dfc_k + 1:2 * dfc_k + 2, :]               # + BN2 bias

    # ---- depthwise (dfc_k, 1) conv along H (BN3 scale folded): whole-row shifted-adds ----
    z = cp[dfc_k + pad:dfc_k + pad + 1, :] * y
    for r in range(-pad, pad + 1):
        if r == 0:
            continue
        sh = _shift_rows(y, r * w2)                          # sh[i] = y[i + r*w2] (mod P)
        cond = (flat >= -r * w2) if r < 0 else (flat < p - r * w2)
        z = z + cp[dfc_k + pad + r:dfc_k + pad + r + 1, :] * jnp.where(cond, sh, 0.0)
    z = z + cp[2 * dfc_k + 2:2 * dfc_k + 3, :]               # + BN3 bias

    # ---- sigmoid gate (EUP exp + approx reciprocal); single compact lane-dense store ----
    o_ref[0] = pl.reciprocal(1.0 + jnp.exp(-z), approx=True).astype(o_ref.dtype)


def dfc_module_pallas(x, params, dfc_k=5):
    """Pallas implementation of DFCModule.forward (downscale=True, k=1, s=1)."""
    n, c1, h, w = x.shape
    assert h % 2 == 0 and w % 2 == 0 and h == w, \
        "F.interpolate(size=x.shape[-1], mode='nearest') assumes square, even spatial dims"
    h2, w2 = h // 2, w // 2
    p = h2 * w2

    (w1, (g1, be1, m1, v1), wh, (g2, be2, m2, v2), wv, (g3, be3, m3, v3)) = params
    c2 = w1.shape[0]
    eps = 1e-5

    # fold eval-mode BatchNorm into scale / bias
    s1 = g1 / jnp.sqrt(v1 + eps); b1 = be1 - m1 * s1
    s2 = g2 / jnp.sqrt(v2 + eps); b2 = be2 - m2 * s2
    s3 = g3 / jnp.sqrt(v3 + eps); b3 = be3 - m3 * s3

    # 1x1 conv weight with BN1 scale folded, channels-last, bf16 MXU operand: (C1, C2)
    w1f = (w1[:, :, 0, 0] * s1[:, None]).T.astype(jnp.bfloat16)

    # depthwise taps (BN2/BN3 scales folded) + the three BN biases, one array: (2k+3, C2)
    whk = wh[:, 0, 0, :].T * s2[None, :]                    # (dfc_k, C2)
    wvk = wv[:, 0, :, 0].T * s3[None, :]                    # (dfc_k, C2)
    cpar = jnp.concatenate([whk, wvk, b1[None], b2[None], b3[None]],
                           axis=0).astype(jnp.float32)      # (2*dfc_k + 3, C2)

    # channel padding / blocking: keep output stores lane-dense and feed both v7x cores.
    if c2 > 128 and c2 % 128 != 0:
        c2p = -(-c2 // 128) * 128
        w1f = jnp.pad(w1f, ((0, 0), (0, c2p - c2)))
        cpar = jnp.pad(cpar, ((0, 0), (0, c2p - c2)))
    else:
        c2p = c2
    if c2p > 256 and c2p % 256 == 0:
        tc2 = 256            # v6e-friendly (256-wide MXU); still fits v7x 32 MiB scoped VMEM
    elif c2p > 128 and c2p % 128 == 0:
        tc2 = 128
    else:
        tc2 = c2p
    grid = (n, c2p // tc2)

    # layout plumbing (one fused XLA pass, f32 read -> bf16 write): x (N,C1,H,W) ->
    # (N, 2, 2, H2*W2, C1); channels on lanes, the four members of every 2x2 pooling
    # window split onto leading (major) axes so the in-kernel pool is three adds.
    x_r = (x.reshape(n, c1, h2, 2, w2, 2)
             .transpose(0, 3, 5, 2, 4, 1)
             .reshape(n, 2, 2, p, c1)
             .astype(jnp.bfloat16))

    kernel = functools.partial(_dfc_kernel, w2=w2, dfc_k=dfc_k)
    gate = pl.pallas_call(
        kernel,
        out_shape=jax.ShapeDtypeStruct((n, p, c2p), jnp.float32),
        grid=grid,
        in_specs=[
            pl.BlockSpec((1, 2, 2, p, c1), lambda i, j: (i, 0, 0, 0, 0)),   # x (one batch)
            pl.BlockSpec((c1, tc2), lambda i, j: (0, j)),                   # folded 1x1 weights
            pl.BlockSpec((2 * dfc_k + 3, tc2), lambda i, j: (0, j)),        # taps + biases
        ],
        out_specs=pl.BlockSpec((1, p, tc2), lambda i, j: (i, 0, j)),        # compact gate
        compiler_params=pltpu.CompilerParams(
            dimension_semantics=("parallel", "parallel")),
    )(x_r, w1f, cpar)

    if c2p != c2:
        gate = gate[:, :, :c2]

    # single fused XLA pass: compact gate -> nearest-2x upsample in NCHW (the module output)
    g = gate.reshape(n, h2, w2, c2)
    out = jnp.broadcast_to(g[:, :, None, :, None, :], (n, h2, 2, w2, 2, c2))
    out = out.transpose(0, 5, 1, 2, 3, 4).reshape(n, c2, h, w)
    return out


def dfc_module_ref(x, params, dfc_k=5):
    """Pure-JAX reference mirroring the PyTorch forward (eval-mode BN)."""
    (w1, (g1, be1, m1, v1), wh, (g2, be2, m2, v2), wv, (g3, be3, m3, v3)) = params
    eps = 1e-5
    pad = dfc_k // 2
    n, c1, h, w = x.shape
    c2 = w1.shape[0]
    hi = lax.Precision.HIGHEST

    def bn(t, g, be, m, v):
        return (t - m[None, :, None, None]) / jnp.sqrt(v + eps)[None, :, None, None] \
               * g[None, :, None, None] + be[None, :, None, None]

    r = x.reshape(n, c1, h // 2, 2, w // 2, 2).mean(axis=(3, 5))     # avg_pool2d(2, 2)
    r = lax.conv_general_dilated(r, w1, (1, 1), 'VALID',
                                 dimension_numbers=('NCHW', 'OIHW', 'NCHW'), precision=hi)
    r = bn(r, g1, be1, m1, v1)
    r = lax.conv_general_dilated(r, wh, (1, 1), ((0, 0), (pad, pad)),
                                 dimension_numbers=('NCHW', 'OIHW', 'NCHW'),
                                 feature_group_count=c2, precision=hi)
    r = bn(r, g2, be2, m2, v2)
    r = lax.conv_general_dilated(r, wv, (1, 1), ((pad, pad), (0, 0)),
                                 dimension_numbers=('NCHW', 'OIHW', 'NCHW'),
                                 feature_group_count=c2, precision=hi)
    r = bn(r, g3, be3, m3, v3)
    r = jax.nn.sigmoid(r)
    r = jnp.repeat(jnp.repeat(r, 2, axis=2), 2, axis=3)              # nearest x2
    return r


def init_params(key, c1, c2, dfc_k=5):
    keys = jax.random.split(key, 6)
    w1 = jax.random.normal(keys[0], (c2, c1, 1, 1), jnp.float32) * (1.0 / math.sqrt(c1))
    wh = jax.random.normal(keys[1], (c2, 1, 1, dfc_k), jnp.float32) * (1.0 / math.sqrt(dfc_k))
    wv = jax.random.normal(keys[2], (c2, 1, dfc_k, 1), jnp.float32) * (1.0 / math.sqrt(dfc_k))

    def bn_params(k):
        ka, kb, kc, kd = jax.random.split(k, 4)
        gamma = 1.0 + 0.1 * jax.random.normal(ka, (c2,), jnp.float32)
        beta = 0.1 * jax.random.normal(kb, (c2,), jnp.float32)
        mean = 0.1 * jax.random.normal(kc, (c2,), jnp.float32)
        var = 0.5 + jnp.abs(jax.random.normal(kd, (c2,), jnp.float32))
        return gamma, beta, mean, var

    return (w1, bn_params(keys[3]), wh, bn_params(keys[4]), wv, bn_params(keys[5]))


if __name__ == "__main__":
    key = jax.random.PRNGKey(0)
    kx, kp = jax.random.split(key)

    N, C1, C2, H = 2, 4, 8, 16           # DFCModule(c1=4, c2=8, k=1, s=1, dfc_k=5)
    x = jax.random.normal(kx, (N, C1, H, H), jnp.float32)
    params = init_params(kp, C1, C2)

    out = dfc_module_pallas(x, params)
    out = jax.block_until_ready(out)

    ref = dfc_module_ref(x, params)
    assert out.shape == (N, C2, H, H), out.shape
    max_err = float(jnp.max(jnp.abs(out - ref)))
    assert max_err < 5e-3, f"max abs error {max_err}"

    print("KERNEL_OK")
</pallas_src>

<mosaic_0001>
module attributes {stable_mosaic.version = 11 : i64} {
  func.func @_dfc_kernel(%arg0: i32, %arg1: i32, %arg2: memref<1x2x2x64x4xbf16, #tpu.memory_space<vmem>>, %arg3: memref<4x8xbf16, #tpu.memory_space<vmem>>, %arg4: memref<13x8xf32, #tpu.memory_space<vmem>>, %arg5: memref<1x64x8xf32, #tpu.memory_space<vmem>>) attributes {dimension_semantics = [#tpu.dimension_semantics<parallel>, #tpu.dimension_semantics<parallel>], iteration_bounds = array<i64: 2, 1>, scalar_prefetch = 0 : i64, scratch_operands = 0 : i64, tpu.core_type = #tpu.core_type<tc>, window_params = [{transform_indices = @transform_0, window_bounds = array<i64: 1, 2, 2, 64, 4>}, {transform_indices = @transform_1, window_bounds = array<i64: 4, 8>}, {transform_indices = @transform_2, window_bounds = array<i64: 13, 8>}, {transform_indices = @transform_3, window_bounds = array<i64: 1, 64, 8>}]} {
    %c0 = arith.constant 0 : index
    %c0_0 = arith.constant 0 : index
    %c0_1 = arith.constant 0 : index
    %c0_2 = arith.constant 0 : index
    %c0_3 = arith.constant 0 : index
    %0 = vector.load %arg2[%c0, %c0_0, %c0_1, %c0_2, %c0_3] : memref<1x2x2x64x4xbf16, #tpu.memory_space<vmem>>, vector<1x1x1x64x4xbf16>
    %1 = vector.shape_cast %0 : vector<1x1x1x64x4xbf16> to vector<64x4xbf16>
    %2 = arith.extf %1 : vector<64x4xbf16> to vector<64x4xf32>
    %c0_4 = arith.constant 0 : index
    %c0_5 = arith.constant 0 : index
    %c1 = arith.constant 1 : index
    %c0_6 = arith.constant 0 : index
    %c0_7 = arith.constant 0 : index
    %3 = vector.load %arg2[%c0_4, %c0_5, %c1, %c0_6, %c0_7] : memref<1x2x2x64x4xbf16, #tpu.memory_space<vmem>>, vector<1x1x1x64x4xbf16>
    %4 = vector.shape_cast %3 : vector<1x1x1x64x4xbf16> to vector<64x4xbf16>
    %5 = arith.extf %4 : vector<64x4xbf16> to vector<64x4xf32>
    %6 = arith.addf %2, %5 : vector<64x4xf32>
    %c0_8 = arith.constant 0 : index
    %c1_9 = arith.constant 1 : index
    %c0_10 = arith.constant 0 : index
    %c0_11 = arith.constant 0 : index
    %c0_12 = arith.constant 0 : index
    %7 = vector.load %arg2[%c0_8, %c1_9, %c0_10, %c0_11, %c0_12] : memref<1x2x2x64x4xbf16, #tpu.memory_space<vmem>>, vector<1x1x1x64x4xbf16>
    %8 = vector.shape_cast %7 : vector<1x1x1x64x4xbf16> to vector<64x4xbf16>
    %9 = arith.extf %8 : vector<64x4xbf16> to vector<64x4xf32>
    %10 = arith.addf %6, %9 : vector<64x4xf32>
    %c0_13 = arith.constant 0 : index
    %c1_14 = arith.constant 1 : index
    %c1_15 = arith.constant 1 : index
    %c0_16 = arith.constant 0 : index
    %c0_17 = arith.constant 0 : index
    %11 = vector.load %arg2[%c0_13, %c1_14, %c1_15, %c0_16, %c0_17] : memref<1x2x2x64x4xbf16, #tpu.memory_space<vmem>>, vector<1x1x1x64x4xbf16>
    %12 = vector.shape_cast %11 : vector<1x1x1x64x4xbf16> to vector<64x4xbf16>
    %13 = arith.extf %12 : vector<64x4xbf16> to vector<64x4xf32>
    %14 = arith.addf %10, %13 : vector<64x4xf32>
    %cst = arith.constant 2.500000e-01 : f32
    %15 = vector.broadcast %cst : f32 to vector<64x4xf32>
    %16 = arith.mulf %15, %14 : vector<64x4xf32>
    %c0_18 = arith.constant 0 : index
    %c0_19 = arith.constant 0 : index
    %17 = vector.load %arg4[%c0_18, %c0_19] : memref<13x8xf32, #tpu.memory_space<vmem>>, vector<13x8xf32>
    %18 = arith.truncf %16 : vector<64x4xf32> to vector<64x4xbf16>
    %c0_20 = arith.constant 0 : index
    %c0_21 = arith.constant 0 : index
    %19 = vector.load %arg3[%c0_20, %c0_21] : memref<4x8xbf16, #tpu.memory_space<vmem>>, vector<4x8xbf16>
    %cst_22 = arith.constant dense<0.000000e+00> : vector<64x8xf32>
    %20 = tpu.matmul %18, %19, %cst_22 {dimension_numbers = #tpu.dot_dimension_numbers<[1], [0], [0], [1], [0, 0, 1, 1], [], []>} : vector<64x4xbf16>, vector<4x8xbf16>, vector<64x8xf32> -> vector<64x8xf32>
    %21 = vector.extract_strided_slice %17 {offsets = [10, 0], sizes = [1, 8], strides = [1, 1]} : vector<13x8xf32> to vector<1x8xf32>
    %22 = vector.broadcast %21 : vector<1x8xf32> to vector<64x8xf32>
    %23 = arith.addf %20, %22 : vector<64x8xf32>
    %24 = tpu.iota {dimensions = array<i32: 0>} : vector<64x8xi32>
    %c7_i32 = arith.constant 7 : i32
    %25 = vector.broadcast %c7_i32 : i32 to vector<64x8xi32>
    %26 = arith.andi %24, %25 : vector<64x8xi32>
    %27 = vector.extract_strided_slice %17 {offsets = [2, 0], sizes = [1, 8], strides = [1, 1]} : vector<13x8xf32> to vector<1x8xf32>
    %28 = vector.broadcast %27 : vector<1x8xf32> to vector<64x8xf32>
    %29 = arith.mulf %28, %23 : vector<64x8xf32>
    %30 = vector.extract_strided_slice %23 {offsets = [62, 0], sizes = [2, 8], strides = [1, 1]} : vector<64x8xf32> to vector<2x8xf32>
    %31 = vector.extract_strided_slice %23 {offsets = [0, 0], sizes = [62, 8], strides = [1, 1]} : vector<64x8xf32> to vector<62x8xf32>
    %32 = tpu.concatenate %30, %31 in 0 : vector<2x8xf32>, vector<62x8xf32> -> vector<64x8xf32>
    %c2_i32 = arith.constant 2 : i32
    %33 = vector.broadcast %c2_i32 : i32 to vector<64x8xi32>
    %34 = arith.cmpi sge, %26, %33 : vector<64x8xi32>
    %35 = vector.extract_strided_slice %17 {offsets = [0, 0], sizes = [1, 8], strides = [1, 1]} : vector<13x8xf32> to vector<1x8xf32>
    %cst_23 = arith.constant 0.000000e+00 : f32
    %36 = vector.broadcast %cst_23 : f32 to vector<64x8xf32>
    %37 = arith.select %34, %32, %36 : vector<64x8xi1>, vector<64x8xf32>
    %38 = vector.broadcast %35 : vector<1x8xf32> to vector<64x8xf32>
    %39 = arith.mulf %38, %37 : vector<64x8xf32>
    %40 = arith.addf %29, %39 : vector<64x8xf32>
    %41 = vector.extract_strided_slice %23 {offsets = [63, 0], sizes = [1, 8], strides = [1, 1]} : vector<64x8xf32> to vector<1x8xf32>
    %42 = vector.extract_strided_slice %23 {offsets = [0, 0], sizes = [63, 8], strides = [1, 1]} : vector<64x8xf32> to vector<63x8xf32>
    %43 = tpu.concatenate %41, %42 in 0 : vector<1x8xf32>, vector<63x8xf32> -> vector<64x8xf32>
    %c1_i32 = arith.constant 1 : i32
    %44 = vector.broadcast %c1_i32 : i32 to vector<64x8xi32>
    %45 = arith.cmpi sge, %26, %44 : vector<64x8xi32>
    %46 = vector.extract_strided_slice %17 {offsets = [1, 0], sizes = [1, 8], strides = [1, 1]} : vector<13x8xf32> to vector<1x8xf32>
    %cst_24 = arith.constant 0.000000e+00 : f32
    %47 = vector.broadcast %cst_24 : f32 to vector<64x8xf32>
    %48 = arith.select %45, %43, %47 : vector<64x8xi1>, vector<64x8xf32>
    %49 = vector.broadcast %46 : vector<1x8xf32> to vector<64x8xf32>
    %50 = arith.mulf %49, %48 : vector<64x8xf32>
    %51 = arith.addf %40, %50 : vector<64x8xf32>
    %52 = vector.extract_strided_slice %23 {offsets = [1, 0], sizes = [63, 8], strides = [1, 1]} : vector<64x8xf32> to vector<63x8xf32>
    %53 = vector.extract_strided_slice %23 {offsets = [0, 0], sizes = [1, 8], strides = [1, 1]} : vector<64x8xf32> to vector<1x8xf32>
    %54 = tpu.concatenate %52, %53 in 0 : vector<63x8xf32>, vector<1x8xf32> -> vector<64x8xf32>
    %c7_i32_25 = arith.constant 7 : i32
    %55 = vector.broadcast %c7_i32_25 : i32 to vector<64x8xi32>
    %56 = arith.cmpi slt, %26, %55 : vector<64x8xi32>
    %57 = vector.extract_strided_slice %17 {offsets = [3, 0], sizes = [1, 8], strides = [1, 1]} : vector<13x8xf32> to vector<1x8xf32>
    %cst_26 = arith.constant 0.000000e+00 : f32
    %58 = vector.broadcast %cst_26 : f32 to vector<64x8xf32>
    %59 = arith.select %56, %54, %58 : vector<64x8xi1>, vector<64x8xf32>
    %60 = vector.broadcast %57 : vector<1x8xf32> to vector<64x8xf32>
    %61 = arith.mulf %60, %59 : vector<64x8xf32>
    %62 = arith.addf %51, %61 : vector<64x8xf32>
    %63 = vector.extract_strided_slice %23 {offsets = [2, 0], sizes = [62, 8], strides = [1, 1]} : vector<64x8xf32> to vector<62x8xf32>
    %64 = vector.extract_strided_slice %23 {offsets = [0, 0], sizes = [2, 8], strides = [1, 1]} : vector<64x8xf32> to vector<2x8xf32>
    %65 = tpu.concatenate %63, %64 in 0 : vector<62x8xf32>, vector<2x8xf32> -> vector<64x8xf32>
    %c6_i32 = arith.constant 6 : i32
    %66 = vector.broadcast %c6_i32 : i32 to vector<64x8xi32>
    %67 = arith.cmpi slt, %26, %66 : vector<64x8xi32>
    %68 = vector.extract_strided_slice %17 {offsets = [4, 0], sizes = [1, 8], strides = [1, 1]} : vector<13x8xf32> to vector<1x8xf32>
    %cst_27 = arith.constant 0.000000e+00 : f32
    %69 = vector.broadcast %cst_27 : f32 to vector<64x8xf32>
    %70 = arith.select %67, %65, %69 : vector<64x8xi1>, vector<64x8xf32>
    %71 = vector.broadcast %68 : vector<1x8xf32> to vector<64x8xf32>
    %72 = arith.mulf %71, %70 : vector<64x8xf32>
    %73 = arith.addf %62, %72 : vector<64x8xf32>
    %74 = vector.extract_strided_slice %17 {offsets = [11, 0], sizes = [1, 8], strides = [1, 1]} : vector<13x8xf32> to vector<1x8xf32>
    %75 = vector.broadcast %74 : vector<1x8xf32> to vector<64x8xf32>
    %76 = arith.addf %73, %75 : vector<64x8xf32>
    %77 = vector.extract_strided_slice %17 {offsets = [7, 0], sizes = [1, 8], strides = [1, 1]} : vector<13x8xf32> to vector<1x8xf32>
    %78 = vector.broadcast %77 : vector<1x8xf32> to vector<64x8xf32>
    %79 = arith.mulf %78, %76 : vector<64x8xf32>
    %80 = vector.extract_strided_slice %76 {offsets = [48, 0], sizes = [16, 8], strides = [1, 1]} : vector<64x8xf32> to vector<16x8xf32>
    %81 = vector.extract_strided_slice %76 {offsets = [0, 0], sizes = [48, 8], strides = [1, 1]} : vector<64x8xf32> to vector<48x8xf32>
    %82 = tpu.concatenate %80, %81 in 0 : vector<16x8xf32>, vector<48x8xf32> -> vector<64x8xf32>
    %c16_i32 = arith.constant 16 : i32
    %83 = vector.broadcast %c16_i32 : i32 to vector<64x8xi32>
    %84 = arith.cmpi sge, %24, %83 : vector<64x8xi32>
    %85 = vector.extract_strided_slice %17 {offsets = [5, 0], sizes = [1, 8], strides = [1, 1]} : vector<13x8xf32> to vector<1x8xf32>
    %cst_28 = arith.constant 0.000000e+00 : f32
    %86 = vector.broadcast %cst_28 : f32 to vector<64x8xf32>
    %87 = arith.select %84, %82, %86 : vector<64x8xi1>, vector<64x8xf32>
    %88 = vector.broadcast %85 : vector<1x8xf32> to vector<64x8xf32>
    %89 = arith.mulf %88, %87 : vector<64x8xf32>
    %90 = arith.addf %79, %89 : vector<64x8xf32>
    %91 = vector.extract_strided_slice %76 {offsets = [56, 0], sizes = [8, 8], strides = [1, 1]} : vector<64x8xf32> to vector<8x8xf32>
    %92 = vector.extract_strided_slice %76 {offsets = [0, 0], sizes = [56, 8], strides = [1, 1]} : vector<64x8xf32> to vector<56x8xf32>
    %93 = tpu.concatenate %91, %92 in 0 : vector<8x8xf32>, vector<56x8xf32> -> vector<64x8xf32>
    %c8_i32 = arith.constant 8 : i32
    %94 = vector.broadcast %c8_i32 : i32 to vector<64x8xi32>
    %95 = arith.cmpi sge, %24, %94 : vector<64x8xi32>
    %96 = vector.extract_strided_slice %17 {offsets = [6, 0], sizes = [1, 8], strides = [1, 1]} : vector<13x8xf32> to vector<1x8xf32>
    %cst_29 = arith.constant 0.000000e+00 : f32
    %97 = vector.broadcast %cst_29 : f32 to vector<64x8xf32>
    %98 = arith.select %95, %93, %97 : vector<64x8xi1>, vector<64x8xf32>
    %99 = vector.broadcast %96 : vector<1x8xf32> to vector<64x8xf32>
    %100 = arith.mulf %99, %98 : vector<64x8xf32>
    %101 = arith.addf %90, %100 : vector<64x8xf32>
    %102 = vector.extract_strided_slice %76 {offsets = [8, 0], sizes = [56, 8], strides = [1, 1]} : vector<64x8xf32> to vector<56x8xf32>
    %103 = vector.extract_strided_slice %76 {offsets = [0, 0], sizes = [8, 8], strides = [1, 1]} : vector<64x8xf32> to vector<8x8xf32>
    %104 = tpu.concatenate %102, %103 in 0 : vector<56x8xf32>, vector<8x8xf32> -> vector<64x8xf32>
    %c56_i32 = arith.constant 56 : i32
    %105 = vector.broadcast %c56_i32 : i32 to vector<64x8xi32>
    %106 = arith.cmpi slt, %24, %105 : vector<64x8xi32>
    %107 = vector.extract_strided_slice %17 {offsets = [8, 0], sizes = [1, 8], strides = [1, 1]} : vector<13x8xf32> to vector<1x8xf32>
    %cst_30 = arith.constant 0.000000e+00 : f32
    %108 = vector.broadcast %cst_30 : f32 to vector<64x8xf32>
    %109 = arith.select %106, %104, %108 : vector<64x8xi1>, vector<64x8xf32>
    %110 = vector.broadcast %107 : vector<1x8xf32> to vector<64x8xf32>
    %111 = arith.mulf %110, %109 : vector<64x8xf32>
    %112 = arith.addf %101, %111 : vector<64x8xf32>
    %113 = vector.extract_strided_slice %76 {offsets = [16, 0], sizes = [48, 8], strides = [1, 1]} : vector<64x8xf32> to vector<48x8xf32>
    %114 = vector.extract_strided_slice %76 {offsets = [0, 0], sizes = [16, 8], strides = [1, 1]} : vector<64x8xf32> to vector<16x8xf32>
    %115 = tpu.concatenate %113, %114 in 0 : vector<48x8xf32>, vector<16x8xf32> -> vector<64x8xf32>
    %c48_i32 = arith.constant 48 : i32
    %116 = vector.broadcast %c48_i32 : i32 to vector<64x8xi32>
    %117 = arith.cmpi slt, %24, %116 : vector<64x8xi32>
    %118 = vector.extract_strided_slice %17 {offsets = [9, 0], sizes = [1, 8], strides = [1, 1]} : vector<13x8xf32> to vector<1x8xf32>
    %cst_31 = arith.constant 0.000000e+00 : f32
    %119 = vector.broadcast %cst_31 : f32 to vector<64x8xf32>
    %120 = arith.select %117, %115, %119 : vector<64x8xi1>, vector<64x8xf32>
    %121 = vector.broadcast %118 : vector<1x8xf32> to vector<64x8xf32>
    %122 = arith.mulf %121, %120 : vector<64x8xf32>
    %123 = arith.addf %112, %122 : vector<64x8xf32>
    %124 = vector.extract_strided_slice %17 {offsets = [12, 0], sizes = [1, 8], strides = [1, 1]} : vector<13x8xf32> to vector<1x8xf32>
    %125 = vector.broadcast %124 : vector<1x8xf32> to vector<64x8xf32>
    %126 = arith.addf %123, %125 : vector<64x8xf32>
    %cst_32 = arith.constant 0.000000e+00 : f32
    %127 = vector.broadcast %cst_32 : f32 to vector<64x8xf32>
    %128 = arith.subf %127, %126 : vector<64x8xf32>
    %129 = math.exp %128 : vector<64x8xf32>
    %cst_33 = arith.constant 1.000000e+00 : f32
    %130 = vector.broadcast %cst_33 : f32 to vector<64x8xf32>
    %131 = arith.addf %130, %129 : vector<64x8xf32>
    %132 = tpu.reciprocal %131 {approx = true} : vector<64x8xf32> -> vector<64x8xf32>
    %c0_34 = arith.constant 0 : index
    %c0_35 = arith.constant 0 : index
    %c0_36 = arith.constant 0 : index
    %133 = vector.load %arg5[%c0_34, %c0_35, %c0_36] : memref<1x64x8xf32, #tpu.memory_space<vmem>>, vector<1x64x8xf32>
    %134 = vector.shape_cast %133 : vector<1x64x8xf32> to vector<64x8xf32>
    %135 = vector.shape_cast %132 : vector<64x8xf32> to vector<1x64x8xf32>
    tpu.vector_store %arg5[%c0_34, %c0_35, %c0_36], %135 {strides = array<i32>} : memref<1x64x8xf32, #tpu.memory_space<vmem>>, vector<1x64x8xf32>,
    return
  }
  func.func @transform_0(%arg0: i32, %arg1: i32) -> (i32, i32, i32, i32, i32) {
    %c0_i32 = arith.constant 0 : i32
    %c0_i32_0 = arith.constant 0 : i32
    %c0_i32_1 = arith.constant 0 : i32
    %c0_i32_2 = arith.constant 0 : i32
    %c0_i32_3 = arith.constant 0 : i32
    return %arg0, %c0_i32, %c0_i32_0, %c0_i32_1, %c0_i32_2 : i32, i32, i32, i32, i32
  }
  func.func @transform_1(%arg0: i32, %arg1: i32) -> (i32, i32) {
    %c0_i32 = arith.constant 0 : i32
    %c0_i32_0 = arith.constant 0 : i32
    return %c0_i32, %arg1 : i32, i32
  }
  func.func @transform_2(%arg0: i32, %arg1: i32) -> (i32, i32) {
    %c0_i32 = arith.constant 0 : i32
    %c0_i32_0 = arith.constant 0 : i32
    return %c0_i32, %arg1 : i32, i32
  }
  func.func @transform_3(%arg0: i32, %arg1: i32) -> (i32, i32, i32) {
    %c0_i32 = arith.constant 0 : i32
    %c0_i32_0 = arith.constant 0 : i32
    return %arg0, %c0_i32, %arg1 : i32, i32, i32
  }
}

</mosaic_0001>

<llo_original>
// kernel: tpu_custom_call.1
$region0: #{tpu_custom_call.1}
  #allocation0 [shape = 'u32[]', space=smem, size = 0x4, offset = 0x4, fixed_abs, tag = 'smem constant byte address 0x4 - core index']
  #allocation1 [shape = 'u32[144,128]{1,0:T(1,128)}', space=vmem, size = 0x12000, scoped, tag = 'internal scratch']
  %s0 = inlined_call_operand.vmem [shape: bf16[2,2,2,64,4], index: 0, kind: input, shape index: {}]
  %s1 = inlined_call_operand.vmem [shape: bf16[4,8], index: 1, kind: input, shape index: {}]
  %s2 = inlined_call_operand.vmem [shape: f32[13,8], index: 2, kind: input, shape index: {}]
  %s3 = inlined_call_operand.vmem [shape: f32[2,64,8], index: 3, kind: output, shape index: {}]
  %s4 = sld [smem:[#allocation0]]
  $region45: #{tpu_custom_call.1} parent=0
    _
  %s6 = ssub.s32 1, %s4
  %s7 = scalar_select 0, %s6, %s4
  loop: start=0, step=1, limit=4
  $region2: #{tpu_custom_call.1} parent=0 // loop_pre_header
    _
  $region3: #{tpu_custom_call.1} parent=0 // loop_header
    %s9 = sphi 0, %s13
    %p10 = scmp.ge.s32.totalorder %s9, 4
    %s16 = sphi 0, %s28
    %s17 = sphi 0, %s24
    %s18 = sphi 0, %s16
    %s19 = sphi 0, %s17
    %s20 = sphi 0, %s18
    %s21 = sphi 0, %s19
    %s31 = sphi 0, %s33
    %s34 = sphi 0, %s31
    %s35 = sphi 0, %s34
    %s51 = sphi 0, %s35
    %s57 = sphi 0, %s59
    %s60 = sphi 0, %s57
    %s61 = sphi 0, %s60
    %s77 = sphi 0, %s61
    %s83 = sphi 0, %s85
    %s86 = sphi 0, %s83
    %s87 = sphi 0, %s86
    %s103 = sphi 0, %s87
    %s111 = sphi 0, %s113
    %s114 = sphi 0, %s111
    %s115 = sphi 0, %s114
    %s131 = sphi 0, %s115
  $region4: #{tpu_custom_call.1} parent=0 // loop_header_branch
    %12 = sbr.rel (%p10) target = $region8
  $region5: #{tpu_custom_call.1} parent=0 // loop_body
    %s14 = ssub.s32 %s9, 1
    %s15 = ssub.s32 %s9, 2
    %s22 = sadd.s32 1, %s17
    %p23 = scmp.ge.s32.totalorder %s22, 1
    %s24 = scalar_select %p23, 0, %s22
    %s25 = sadd.s32 1, %s16
    %s26 = scalar_select %p23, %s25, %s16
    %p27 = scmp.ge.s32.totalorder %s26, 2
    %s28 = scalar_select %p27, 0, %s26
    %s29 = ssub.s32 %s16, %s28
    %p30 = scmp.eq.s32.totalorder %s29, 0
    %s32 = sadd.s32 %s31, 1
    %s33 = scalar_select %p30, %s31, %s32
    %p36 = pneg %p30
    %p37 = scmp.eq.s32.totalorder %s9, 1
    %p38 = por %p36, %p37
    %p39 = scmp.ne.s32.totalorder %s31, %s34
    %p40 = scmp.eq.s32.totalorder %s9, 0
    %p41 = por %p39, %p40
    %p42 = scmp.ne.s32.totalorder %s31, %s34
    %p43 = scmp.eq.s32.totalorder %s14, 1
    %p44 = por %p42, %p43
    %p45 = scmp.ne.s32.totalorder %s34, %s35
    %p46 = scmp.eq.s32.totalorder %s14, 0
    %p47 = por %p45, %p46
    %p48 = scmp.ne.s32.totalorder %s34, %s35
    %p49 = scmp.eq.s32.totalorder %s15, 1
    %p50 = por %p48, %p49
    %p52 = scmp.ne.s32.totalorder %s35, %s51
    %p53 = scmp.eq.s32.totalorder %s15, 0
    %p54 = por %p52, %p53
    %s55 = ssub.s32 %s17, %s24
    %p56 = scmp.eq.s32.totalorder %s55, 0
    %s58 = sadd.s32 %s57, 1
    %s59 = scalar_select %p56, %s57, %s58
    %p62 = pneg %p56
    %p63 = scmp.eq.s32.totalorder %s9, 1
    %p64 = por %p62, %p63
    %p65 = scmp.ne.s32.totalorder %s57, %s60
    %p66 = scmp.eq.s32.totalorder %s9, 0
    %p67 = por %p65, %p66
    %p68 = scmp.ne.s32.totalorder %s57, %s60
    %p69 = scmp.eq.s32.totalorder %s14, 1
    %p70 = por %p68, %p69
    %p71 = scmp.ne.s32.totalorder %s60, %s61
    %p72 = scmp.eq.s32.totalorder %s14, 0
    %p73 = por %p71, %p72
    %p74 = scmp.ne.s32.totalorder %s60, %s61
    %p75 = scmp.eq.s32.totalorder %s15, 1
    %p76 = por %p74, %p75
    %p78 = scmp.ne.s32.totalorder %s61, %s77
    %p79 = scmp.eq.s32.totalorder %s15, 0
    %p80 = por %p78, %p79
    %s81 = ssub.s32 %s17, %s24
    %p82 = scmp.eq.s32.totalorder %s81, 0
    %s84 = sadd.s32 %s83, 1
    %s85 = scalar_select %p82, %s83, %s84
    %p88 = pneg %p82
    %p89 = scmp.eq.s32.totalorder %s9, 1
    %p90 = por %p88, %p89
    %p91 = scmp.ne.s32.totalorder %s83, %s86
    %p92 = scmp.eq.s32.totalorder %s9, 0
    %p93 = por %p91, %p92
    %p94 = scmp.ne.s32.totalorder %s83, %s86
    %p95 = scmp.eq.s32.totalorder %s14, 1
    %p96 = por %p94, %p95
    %p97 = scmp.ne.s32.totalorder %s86, %s87
    %p98 = scmp.eq.s32.totalorder %s14, 0
    %p99 = por %p97, %p98
    %p100 = scmp.ne.s32.totalorder %s86, %s87
    %p101 = scmp.eq.s32.totalorder %s15, 1
    %p102 = por %p100, %p101
    %p104 = scmp.ne.s32.totalorder %s87, %s103
    %p105 = scmp.eq.s32.totalorder %s15, 0
    %p106 = por %p104, %p105
    %s107 = ssub.s32 %s16, %s28
    %s108 = ssub.s32 %s17, %s24
    %s109 = sor.u32 %s107, %s108
    %p110 = scmp.eq.s32.totalorder %s109, 0
    %s112 = sadd.s32 %s111, 1
    %s113 = scalar_select %p110, %s111, %s112
    %p116 = pneg %p110
    %p117 = scmp.eq.s32.totalorder %s9, 1
    %p118 = por %p116, %p117
    %p119 = scmp.ne.s32.totalorder %s111, %s114
    %p120 = scmp.eq.s32.totalorder %s9, 0
    %p121 = por %p119, %p120
    %p122 = scmp.ne.s32.totalorder %s111, %s114
    %p123 = scmp.eq.s32.totalorder %s14, 1
    %p124 = por %p122, %p123
    %p125 = scmp.ne.s32.totalorder %s114, %s115
    %p126 = scmp.eq.s32.totalorder %s14, 0
    %p127 = por %p125, %p126
    %p128 = scmp.ne.s32.totalorder %s114, %s115
    %p129 = scmp.eq.s32.totalorder %s15, 1
    %p130 = por %p128, %p129
    %p132 = scmp.ne.s32.totalorder %s115, %s131
    %p133 = scmp.eq.s32.totalorder %s15, 0
    %p134 = por %p132, %p133
    %p135 = scmp.le.s32.totalorder 1, %s9
    %p136 = scmp.lt.s32.totalorder %s9, 3
    %p137 = pnand %p135, %p136
    %p138 = pneg %p137
    // Predicated region
    $region9: #{tpu_custom_call.1} parent=5 // pred_check
      _
    $region10: #{tpu_custom_call.1} parent=5 // pred_check_branch
      %140 = sbr.rel (%p137) target = $region12
    $region11: #{tpu_custom_call.1} parent=5 // pred_region
      %s141 = ssub.s32 %s9, 1
      // Predicated region
      $region13: #{tpu_custom_call.1} parent=11 // pred_check
        %p142 = pneg %p73
      $region14: #{tpu_custom_call.1} parent=11 // pred_check_branch
        %144 = sbr.rel (%p142) target = $region16
      $region15: #{tpu_custom_call.1} parent=11 // pred_region
        %p145 = scmp.lt.s32.totalorder %s19, 0
        %s146 = scalar_select %p145, %s19, 0
        %s147 = smul.addr %s146, 2
        %s148 = scalar_lea.vmem %s1, %s147
      $region16: #{tpu_custom_call.1} parent=11 // pred_fallthru
        _
      // Predicated region
      $region17: #{tpu_custom_call.1} parent=11 // pred_check
        %p149 = pneg %p99
      $region18: #{tpu_custom_call.1} parent=11 // pred_check_branch
        %151 = sbr.rel (%p149) target = $region20
      $region19: #{tpu_custom_call.1} parent=11 // pred_region
        %p152 = scmp.lt.s32.totalorder %s19, 0
        %s153 = scalar_select %p152, %s19, 0
        %s154 = smul.addr %s153, 8
        %s155 = scalar_lea.vmem %s2, %s154
      $region20: #{tpu_custom_call.1} parent=11 // pred_fallthru
        _
    $region12: #{tpu_custom_call.1} parent=5 // pred_fallthru
      _
    %p156 = scmp.lt.s32.totalorder %s9, 2
    // Predicated region
    $region21: #{tpu_custom_call.1} parent=5 // pred_check
      %p157 = pneg %p156
    $region22: #{tpu_custom_call.1} parent=5 // pred_check_branch
      %159 = sbr.rel (%p157) target = $region24
    $region23: #{tpu_custom_call.1} parent=5 // pred_region
      // Predicated region
      $region25: #{tpu_custom_call.1} parent=23 // pred_check
        %p160 = pneg %p41
      $region26: #{tpu_custom_call.1} parent=23 // pred_check_branch
        %162 = sbr.rel (%p160) target = $region28
      $region27: #{tpu_custom_call.1} parent=23 // pred_region
        %p163 = scmp.lt.s32.totalorder %s16, 1
        %s164 = scalar_select %p163, %s16, 1
        %s165 = smul.addr %s164, 32
        %s166 = smul.addr %s165, 4
        %s167 = scalar_lea.vmem %s0, %s166
      $region28: #{tpu_custom_call.1} parent=23 // pred_fallthru
        _
    $region24: #{tpu_custom_call.1} parent=5 // pred_fallthru
      _
    %p168 = scmp.le.s32.totalorder 1, %s9
    %p169 = scmp.lt.s32.totalorder %s9, 3
    %p170 = pnand %p168, %p169
    %p171 = pneg %p170
    // Predicated region
    $region29: #{tpu_custom_call.1} parent=5 // pred_check
      _
    $region30: #{tpu_custom_call.1} parent=5 // pred_check_branch
      %173 = sbr.rel (%p170) target = $region32
    $region31: #{tpu_custom_call.1} parent=5 // pred_region
      %s174 = ssub.s32 %s9, 1
      %p175 = scmp.lt.s32.totalorder %s18, 1
      %s176 = scalar_select %p175, %s18, 1
      %s177 = smul.addr %s176, 32
      %s178 = smul.addr %s177, 4
      %s179 = scalar_lea.vmem %s0, %s178
      %p180 = pneg %p47
      %p181 = pneg %p44
      %p182 = scmp.lt.s32.totalorder %s19, 0
      %s183 = scalar_select %p182, %s19, 0
      %s184 = smul.addr %s183, 2
      %s185 = scalar_lea.vmem %s1, %s184
      %p186 = pneg %p73
      %p187 = pneg %p70
      %p188 = scmp.lt.s32.totalorder %s19, 0
      %s189 = scalar_select %p188, %s19, 0
      %s190 = smul.addr %s189, 8
      %s191 = scalar_lea.vmem %s2, %s190
      %p192 = pneg %p99
      %p193 = pneg %p96
      %p194 = pneg %p127
      %p195 = pneg %p124
      %p196 = scmp.lt.s32.totalorder %s18, 1
      %s197 = scalar_select %p196, %s18, 1
      %p198 = scmp.lt.s32.totalorder %s19, 0
      %s199 = scalar_select %p198, %s19, 0
      %s200 = smul.addr %s197, 8
      %s201 = sadd.s32 %s199, %s200
      %s202 = smul.addr %s201, 8
      %s203 = scalar_lea.vmem %s3, %s202
      %p204 = scmp.lt.s32.totalorder %s18, 1
      %s205 = scalar_select %p204, %s18, 1
      %s206 = smul.addr %s205, 32
      %s207 = smul.addr %s206, 4
      %s208 = scalar_lea.vmem %s0, %s207
      %p209 = scmp.lt.s32.totalorder %s19, 0
      %s210 = scalar_select %p209, %s19, 0
      %s211 = smul.addr %s210, 2
      %s212 = scalar_lea.vmem %s1, %s211
      %p213 = scmp.lt.s32.totalorder %s19, 0
      %s214 = scalar_select %p213, %s19, 0
      %s215 = smul.addr %s214, 8
      %s216 = scalar_lea.vmem %s2, %s215
      %p217 = scmp.lt.s32.totalorder %s18, 1
      %s218 = scalar_select %p217, %s18, 1
      %p219 = scmp.lt.s32.totalorder %s19, 0
      %s220 = scalar_select %p219, %s19, 0
      %s221 = smul.addr %s218, 8
      %s222 = sadd.s32 %s220, %s221
      %s223 = smul.addr %s222, 8
      %s224 = scalar_lea.vmem %s3, %s223
      %v226 = vld [vmem:[%s208] sm:$0xf]
      %v227 = vld [vmem:[%s208 + $0x4] sm:$0xf]
      %v228 = vld [vmem:[%s208 + $0x8] sm:$0xf]
      %v229 = vld [vmem:[%s208 + $0xc] sm:$0xf]
      %v230 = vld [vmem:[%s208 + $0x10] sm:$0xf]
      %v231 = vld [vmem:[%s208 + $0x14] sm:$0xf]
      %v232 = vld [vmem:[%s208 + $0x18] sm:$0xf]
      %v233 = vld [vmem:[%s208 + $0x1c] sm:$0xf]
      %v234 = vunpack.c.l.bf16 %v226
      %v235 = vunpack.c.l.bf16 %v227
      %v236 = vunpack.c.l.bf16 %v228
      %v237 = vunpack.c.l.bf16 %v229
      %v238 = vunpack.c.l.bf16 %v230
      %v239 = vunpack.c.l.bf16 %v231
      %v240 = vunpack.c.l.bf16 %v232
      %v241 = vunpack.c.l.bf16 %v233
      %s242 = scalar_lea.vmem %s208, 32
      %v243 = vld [vmem:[%s242] sm:$0xf]
      %v244 = vld [vmem:[%s242 + $0x4] sm:$0xf]
      %v245 = vld [vmem:[%s242 + $0x8] sm:$0xf]
      %v246 = vld [vmem:[%s242 + $0xc] sm:$0xf]
      %v247 = vld [vmem:[%s242 + $0x10] sm:$0xf]
      %v248 = vld [vmem:[%s242 + $0x14] sm:$0xf]
      %v249 = vld [vmem:[%s242 + $0x18] sm:$0xf]
      %v250 = vld [vmem:[%s242 + $0x1c] sm:$0xf]
      %v251 = vunpack.c.l.bf16 %v243
      %v252 = vunpack.c.l.bf16 %v244
      %v253 = vunpack.c.l.bf16 %v245
      %v254 = vunpack.c.l.bf16 %v246
      %v255 = vunpack.c.l.bf16 %v247
      %v256 = vunpack.c.l.bf16 %v248
      %v257 = vunpack.c.l.bf16 %v249
      %v258 = vunpack.c.l.bf16 %v250
      %v259 = vadd.f32 %v234, %v251
      %v260 = vadd.f32 %v235, %v252
      %v261 = vadd.f32 %v236, %v253
      %v262 = vadd.f32 %v237, %v254
      %v263 = vadd.f32 %v238, %v255
      %v264 = vadd.f32 %v239, %v256
      %v265 = vadd.f32 %v240, %v257
      %v266 = vadd.f32 %v241, %v258
      %s267 = scalar_lea.vmem %s208, 64
      %v268 = vld [vmem:[%s267] sm:$0xf]
      %v269 = vld [vmem:[%s267 + $0x4] sm:$0xf]
      %v270 = vld [vmem:[%s267 + $0x8] sm:$0xf]
      %v271 = vld [vmem:[%s267 + $0xc] sm:$0xf]
      %v272 = vld [vmem:[%s267 + $0x10] sm:$0xf]
      %v273 = vld [vmem:[%s267 + $0x14] sm:$0xf]
      %v274 = vld [vmem:[%s267 + $0x18] sm:$0xf]
      %v275 = vld [vmem:[%s267 + $0x1c] sm:$0xf]
      %v276 = vunpack.c.l.bf16 %v268
      %v277 = vunpack.c.l.bf16 %v269
      %v278 = vunpack.c.l.bf16 %v270
      %v279 = vunpack.c.l.bf16 %v271
      %v280 = vunpack.c.l.bf16 %v272
      %v281 = vunpack.c.l.bf16 %v273
      %v282 = vunpack.c.l.bf16 %v274
      %v283 = vunpack.c.l.bf16 %v275
      %v284 = vadd.f32 %v259, %v276
      %v285 = vadd.f32 %v260, %v277
      %v286 = vadd.f32 %v261, %v278
      %v287 = vadd.f32 %v262, %v279
      %v288 = vadd.f32 %v263, %v280
      %v289 = vadd.f32 %v264, %v281
      %v290 = vadd.f32 %v265, %v282
      %v291 = vadd.f32 %v266, %v283
      %s292 = scalar_lea.vmem %s208, 96
      %v293 = vld [vmem:[%s292] sm:$0xf]
      %v294 = vld [vmem:[%s292 + $0x4] sm:$0xf]
      %v295 = vld [vmem:[%s292 + $0x8] sm:$0xf]
      %v296 = vld [vmem:[%s292 + $0xc] sm:$0xf]
      %v297 = vld [vmem:[%s292 + $0x10] sm:$0xf]
      %v298 = vld [vmem:[%s292 + $0x14] sm:$0xf]
      %v299 = vld [vmem:[%s292 + $0x18] sm:$0xf]
      %v300 = vld [vmem:[%s292 + $0x1c] sm:$0xf]
      %v301 = vunpack.c.l.bf16 %v293
      %v302 = vunpack.c.l.bf16 %v294
      %v303 = vunpack.c.l.bf16 %v295
      %v304 = vunpack.c.l.bf16 %v296
      %v305 = vunpack.c.l.bf16 %v297
      %v306 = vunpack.c.l.bf16 %v298
      %v307 = vunpack.c.l.bf16 %v299
      %v308 = vunpack.c.l.bf16 %v300
      %v309 = vadd.f32 %v284, %v301
      %v310 = vadd.f32 %v285, %v302
      %v311 = vadd.f32 %v286, %v303
      %v312 = vadd.f32 %v287, %v304
      %v313 = vadd.f32 %v288, %v305
      %v314 = vadd.f32 %v289, %v306
      %v315 = vadd.f32 %v290, %v307
      %v316 = vadd.f32 %v291, %v308
      %v317 = vmul.f32 %v309, 0.25
      %v318 = vmul.f32 %v310, 0.25
      %v319 = vmul.f32 %v311, 0.25
      %v320 = vmul.f32 %v312, 0.25
      %v321 = vmul.f32 %v313, 0.25
      %v322 = vmul.f32 %v314, 0.25
      %v323 = vmul.f32 %v315, 0.25
      %v324 = vmul.f32 %v316, 0.25
      %v325 = vld [vmem:[%s216] sm:$0xff]
      %v326 = vld [vmem:[%s216 + $0x8] sm:$0x1f]
      %v327 = vpack.c.bf16 %v318, %v317
      %v328 = vpack.c.bf16 %v320, %v319
      %v329 = vpack.c.bf16 %v322, %v321
      %v330 = vpack.c.bf16 %v324, %v323
      %v331 = vld [vmem:[%s212] sm:$0x3]
      %v332 = vlaneseq
      %v333 = vshrl.u32 %v332, 7
      %v334 = vsub.s32 2, %v333
      %v335 = vrot.slane %v326, %v334
      %vm336 = vcmask 31744
      %v338 = vsel %vm336, %v327, 0
      %v341 = vsel %vm336, %v328, 0
      %v344 = vsel %vm336, %v329, 0
      %v347 = vsel %vm336, %v330, 0
      %vm349 = vcmask 1041408
      %v351 = vsel %vm349, %v331, 0
      %353 = vmatprep.subr.bf16.mxu0 0
      %354 = vmatpush1.bf16.msra.mxu0 %v351
      %355 = vmatprep.subr.bf16.mxu0 0
      %356 = vmatpush1.bf16.msra.mxu0 0
      %357 = vmatprep.subr.bf16.mxu0 0
      %358 = vmatpush1.bf16.msra.mxu0 0
      %359 = vmatprep.subr.bf16.mxu0 0
      %360 = vmatpush1.bf16.msra.mxu0 0
      %361 = vmatprep.subr.bf16.mxu0 0
      %362 = vmatpush1.bf16.msra.mxu0 0
      %363 = vmatprep.subr.bf16.mxu0 0
      %364 = vmatpush1.bf16.msra.mxu0 0
      %365 = vmatprep.subr.bf16.mxu0 0
      %366 = vmatpush1.bf16.msra.mxu0 0
      %367 = vmatprep.subr.bf16.mxu0 0
      %368 = vmatpush1.bf16.msra.mxu0 0
      %369 = vmatprep.subr.bf16.mxu0 0
      %370 = vmatpush1.bf16.msra.mxu0 0
      %371 = vmatprep.subr.bf16.mxu0 0
      %372 = vmatpush1.bf16.msra.mxu0 0
      %373 = vmatprep.subr.bf16.mxu0 0
      %374 = vmatpush1.bf16.msra.mxu0 0
      %375 = vmatprep.subr.bf16.mxu0 0
      %376 = vmatpush1.bf16.msra.mxu0 0
      %377 = vmatprep.subr.bf16.mxu0 0
      %378 = vmatpush1.bf16.msra.mxu0 0
      %379 = vmatprep.subr.bf16.mxu0 0
      %380 = vmatpush1.bf16.msra.mxu0 0
      %381 = vmatprep.subr.bf16.mxu0 0
      %382 = vmatpush1.bf16.msra.mxu0 0
      %383 = vmatprep.subr.bf16.mxu0 0
      %384 = vmatpush1.bf16.msra.mxu0 0
      %385 = vmatprep.mubr.bf16.mxu0 0
      %386 = vmatmul.mubr.bf16.gmra.mrb[0].mxu0 %v338
      %v387 = vpop.f32.mrb[0].mxu0
      %v388 = vadd.f32 %v335, %v387
      %v389 = vpop.f32.mrb[0].mxu0
      %v390 = vpop.f32.mrb[0].mxu0
      %v391 = vadd.f32 %v335, %v390
      %v392 = vpop.f32.mrb[0].mxu0
      %393 = vmatprep.mubr.bf16.mxu0 0
      %394 = vmatmul.mubr.bf16.gmra.mrb[0].mxu0 %v341
      %v395 = vpop.f32.mrb[0].mxu0
      %v396 = vadd.f32 %v335, %v395
      %v397 = vpop.f32.mrb[0].mxu0
      %v398 = vpop.f32.mrb[0].mxu0
      %v399 = vadd.f32 %v335, %v398
      %v400 = vpop.f32.mrb[0].mxu0
      %401 = vmatprep.mubr.bf16.mxu0 0
      %402 = vmatmul.mubr.bf16.gmra.mrb[0].mxu0 %v344
      %v403 = vpop.f32.mrb[0].mxu0
      %v404 = vadd.f32 %v335, %v403
      %v405 = vpop.f32.mrb[0].mxu0
      %v406 = vpop.f32.mrb[0].mxu0
      %v407 = vadd.f32 %v335, %v406
      %v408 = vpop.f32.mrb[0].mxu0
      %409 = vmatprep.mubr.bf16.mxu0 0
      %410 = vmatmul.mubr.bf16.gmra.mrb[0].mxu0 %v347
      %v411 = vpop.f32.mrb[0].mxu0
      %v412 = vadd.f32 %v335, %v411
      %v413 = vpop.f32.mrb[0].mxu0
      %v414 = vpop.f32.mrb[0].mxu0
      %v415 = vadd.f32 %v335, %v414
      %v416 = vpop.f32.mrb[0].mxu0
      %417 = vdwg.mxu0
      %v418 = vlaneseq
      %v419 = vshrl.u32 %v418, 7
      %v420 = vadd.s32 %v419, 8
      %v421 = vadd.s32 %v419, 16
      %v422 = vadd.s32 %v419, 24
      %v423 = vadd.s32 %v419, 32
      %v424 = vadd.s32 %v419, 40
      %v425 = vadd.s32 %v419, 48
      %v426 = vadd.s32 %v419, 56
      %v427 = vand.u32 %v419, 7
      %v428 = vand.u32 %v420, 7
      %v429 = vand.u32 %v421, 7
      %v430 = vand.u32 %v422, 7
      %v431 = vand.u32 %v423, 7
      %v432 = vand.u32 %v424, 7
      %v433 = vand.u32 %v425, 7
      %v434 = vand.u32 %v426, 7
      %v435 = vlaneseq
      %v436 = vshrl.u32 %v435, 7
      %v437 = vsub.s32 2, %v436
      %v438 = vrot.slane %v325, %v437
      %v439 = vmul.f32 %v438, %v388
      %v440 = vmul.f32 %v438, %v391
      %v441 = vmul.f32 %v438, %v396
      %v442 = vmul.f32 %v438, %v399
      %v443 = vmul.f32 %v438, %v404
      %v444 = vmul.f32 %v438, %v407
      %v445 = vmul.f32 %v438, %v412
      %v446 = vmul.f32 %v438, %v415
      %v448 = vrot.slane %v415, 6
      %v457 = vrot.slane %v388, 6
      %v458 = vrot.slane %v391, 6
      %v459 = vsel %vm349, %v457, %v458
      %v460 = vrot.slane %v396, 6
      %v461 = vsel %vm349, %v458, %v460
      %v462 = vrot.slane %v399, 6
      %v463 = vsel %vm349, %v460, %v462
      %v464 = vrot.slane %v404, 6
      %v465 = vsel %vm349, %v462, %v464
      %v466 = vrot.slane %v407, 6
      %v467 = vsel %vm349, %v464, %v466
      %v468 = vrot.slane %v412, 6
      %v469 = vsel %vm349, %v466, %v468
      %v470 = vsel %vm349, %v468, %v448
      %v479 = vsel %vm349, %v448, %v457
      %vm480 = vcmp.ge.s32.totalorder %v427, 2
      %vm481 = vcmp.ge.s32.totalorder %v428, 2
      %vm482 = vcmp.ge.s32.totalorder %v429, 2
      %vm483 = vcmp.ge.s32.totalorder %v430, 2
      %vm484 = vcmp.ge.s32.totalorder %v431, 2
      %vm485 = vcmp.ge.s32.totalorder %v432, 2
      %vm486 = vcmp.ge.s32.totalorder %v433, 2
      %vm487 = vcmp.ge.s32.totalorder %v434, 2
      %v488 = vsel %vm480, %v479, 0.0
      %v489 = vsel %vm481, %v459, 0.0
      %v490 = vsel %vm482, %v461, 0.0
      %v491 = vsel %vm483, %v463, 0.0
      %v492 = vsel %vm484, %v465, 0.0
      %v493 = vsel %vm485, %v467, 0.0
      %v494 = vsel %vm486, %v469, 0.0
      %v495 = vsel %vm487, %v470, 0.0
      %v496 = vlaneseq
      %v497 = vshrl.u32 %v496, 7
      %v498 = vsub.s32 0, %v497
      %v499 = vrot.slane %v325, %v498
      %v500 = vmul.f32 %v499, %v488
      %v501 = vmul.f32 %v499, %v489
      %v502 = vmul.f32 %v499, %v490
      %v503 = vmul.f32 %v499, %v491
      %v504 = vmul.f32 %v499, %v492
      %v505 = vmul.f32 %v499, %v493
      %v506 = vmul.f32 %v499, %v494
      %v507 = vmul.f32 %v499, %v495
      %v508 = vadd.f32 %v439, %v500
      %v509 = vadd.f32 %v440, %v501
      %v510 = vadd.f32 %v441, %v502
      %v511 = vadd.f32 %v442, %v503
      %v512 = vadd.f32 %v443, %v504
      %v513 = vadd.f32 %v444, %v505
      %v514 = vadd.f32 %v445, %v506
      %v515 = vadd.f32 %v446, %v507
      %v516 = vrot.slane %v415, 7
      %vm518 = vcmask 1040384
      %v519 = vrot.slane %v388, 7
      %v520 = vrot.slane %v391, 7
      %v521 = vsel %vm518, %v519, %v520
      %v522 = vrot.slane %v396, 7
      %v523 = vsel %vm518, %v520, %v522
      %v524 = vrot.slane %v399, 7
      %v525 = vsel %vm518, %v522, %v524
      %v526 = vrot.slane %v404, 7
      %v527 = vsel %vm518, %v524, %v526
      %v528 = vrot.slane %v407, 7
      %v529 = vsel %vm518, %v526, %v528
      %v530 = vrot.slane %v412, 7
      %v531 = vsel %vm518, %v528, %v530
      %v532 = vsel %vm518, %v530, %v516
      %v541 = vsel %vm518, %v516, %v519
      %vm542 = vcmp.ge.s32.totalorder %v427, 1
      %vm543 = vcmp.ge.s32.totalorder %v428, 1
      %vm544 = vcmp.ge.s32.totalorder %v429, 1
      %vm545 = vcmp.ge.s32.totalorder %v430, 1
      %vm546 = vcmp.ge.s32.totalorder %v431, 1
      %vm547 = vcmp.ge.s32.totalorder %v432, 1
      %vm548 = vcmp.ge.s32.totalorder %v433, 1
      %vm549 = vcmp.ge.s32.totalorder %v434, 1
      %v550 = vsel %vm542, %v541, 0.0
      %v551 = vsel %vm543, %v521, 0.0
      %v552 = vsel %vm544, %v523, 0.0
      %v553 = vsel %vm545, %v525, 0.0
      %v554 = vsel %vm546, %v527, 0.0
      %v555 = vsel %vm547, %v529, 0.0
      %v556 = vsel %vm548, %v531, 0.0
      %v557 = vsel %vm549, %v532, 0.0
      %v558 = vlaneseq
      %v559 = vshrl.u32 %v558, 7
      %v560 = vsub.s32 1, %v559
      %v561 = vrot.slane %v325, %v560
      %v562 = vmul.f32 %v561, %v550
      %v563 = vmul.f32 %v561, %v551
      %v564 = vmul.f32 %v561, %v552
      %v565 = vmul.f32 %v561, %v553
      %v566 = vmul.f32 %v561, %v554
      %v567 = vmul.f32 %v561, %v555
      %v568 = vmul.f32 %v561, %v556
      %v569 = vmul.f32 %v561, %v557
      %v570 = vadd.f32 %v508, %v562
      %v571 = vadd.f32 %v509, %v563
      %v572 = vadd.f32 %v510, %v564
      %v573 = vadd.f32 %v511, %v565
      %v574 = vadd.f32 %v512, %v566
      %v575 = vadd.f32 %v513, %v567
      %v576 = vadd.f32 %v514, %v568
      %v577 = vadd.f32 %v515, %v569
      %vm578 = vcmask 1046528
      %v579 = vrot.slane %v388, 1
      %v580 = vrot.slane %v391, 1
      %v581 = vsel %vm578, %v579, %v580
      %v582 = vrot.slane %v396, 1
      %v583 = vsel %vm578, %v580, %v582
      %v584 = vrot.slane %v399, 1
      %v585 = vsel %vm578, %v582, %v584
      %v586 = vrot.slane %v404, 1
      %v587 = vsel %vm578, %v584, %v586
      %v588 = vrot.slane %v407, 1
      %v589 = vsel %vm578, %v586, %v588
      %v590 = vrot.slane %v412, 1
      %v591 = vsel %vm578, %v588, %v590
      %v592 = vrot.slane %v415, 1
      %v593 = vsel %vm578, %v590, %v592
      %v603 = vsel %vm578, %v592, %v579
      %vm604 = vcmp.lt.s32.totalorder %v427, 7
      %vm605 = vcmp.lt.s32.totalorder %v428, 7
      %vm606 = vcmp.lt.s32.totalorder %v429, 7
      %vm607 = vcmp.lt.s32.totalorder %v430, 7
      %vm608 = vcmp.lt.s32.totalorder %v431, 7
      %vm609 = vcmp.lt.s32.totalorder %v432, 7
      %vm610 = vcmp.lt.s32.totalorder %v433, 7
      %vm611 = vcmp.lt.s32.totalorder %v434, 7
      %v612 = vsel %vm604, %v581, 0.0
      %v613 = vsel %vm605, %v583, 0.0
      %v614 = vsel %vm606, %v585, 0.0
      %v615 = vsel %vm607, %v587, 0.0
      %v616 = vsel %vm608, %v589, 0.0
      %v617 = vsel %vm609, %v591, 0.0
      %v618 = vsel %vm610, %v593, 0.0
      %v619 = vsel %vm611, %v603, 0.0
      %v620 = vlaneseq
      %v621 = vshrl.u32 %v620, 7
      %v622 = vsub.s32 3, %v621
      %v623 = vrot.slane %v325, %v622
      %v624 = vmul.f32 %v623, %v612
      %v625 = vmul.f32 %v623, %v613
      %v626 = vmul.f32 %v623, %v614
      %v627 = vmul.f32 %v623, %v615
      %v628 = vmul.f32 %v623, %v616
      %v629 = vmul.f32 %v623, %v617
      %v630 = vmul.f32 %v623, %v618
      %v631 = vmul.f32 %v623, %v619
      %v632 = vadd.f32 %v570, %v624
      %v633 = vadd.f32 %v571, %v625
      %v634 = vadd.f32 %v572, %v626
      %v635 = vadd.f32 %v573, %v627
      %v636 = vadd.f32 %v574, %v628
      %v637 = vadd.f32 %v575, %v629
      %v638 = vadd.f32 %v576, %v630
      %v639 = vadd.f32 %v577, %v631
      %vm640 = vcmask 1045504
      %v641 = vrot.slane %v388, 2
      %v642 = vrot.slane %v391, 2
      %v643 = vsel %vm640, %v641, %v642
      %v644 = vrot.slane %v396, 2
      %v645 = vsel %vm640, %v642, %v644
      %v646 = vrot.slane %v399, 2
      %v647 = vsel %vm640, %v644, %v646
      %v648 = vrot.slane %v404, 2
      %v649 = vsel %vm640, %v646, %v648
      %v650 = vrot.slane %v407, 2
      %v651 = vsel %vm640, %v648, %v650
      %v652 = vrot.slane %v412, 2
      %v653 = vsel %vm640, %v650, %v652
      %v654 = vrot.slane %v415, 2
      %v655 = vsel %vm640, %v652, %v654
      %v665 = vsel %vm640, %v654, %v641
      %vm666 = vcmp.lt.s32.totalorder %v427, 6
      %vm667 = vcmp.lt.s32.totalorder %v428, 6
      %vm668 = vcmp.lt.s32.totalorder %v429, 6
      %vm669 = vcmp.lt.s32.totalorder %v430, 6
      %vm670 = vcmp.lt.s32.totalorder %v431, 6
      %vm671 = vcmp.lt.s32.totalorder %v432, 6
      %vm672 = vcmp.lt.s32.totalorder %v433, 6
      %vm673 = vcmp.lt.s32.totalorder %v434, 6
      %v674 = vsel %vm666, %v643, 0.0
      %v675 = vsel %vm667, %v645, 0.0
      %v676 = vsel %vm668, %v647, 0.0
      %v677 = vsel %vm669, %v649, 0.0
      %v678 = vsel %vm670, %v651, 0.0
      %v679 = vsel %vm671, %v653, 0.0
      %v680 = vsel %vm672, %v655, 0.0
      %v681 = vsel %vm673, %v665, 0.0
      %v682 = vlaneseq
      %v683 = vshrl.u32 %v682, 7
      %v684 = vsub.s32 4, %v683
      %v685 = vrot.slane %v325, %v684
      %v686 = vmul.f32 %v685, %v674
      %v687 = vmul.f32 %v685, %v675
      %v688 = vmul.f32 %v685, %v676
      %v689 = vmul.f32 %v685, %v677
      %v690 = vmul.f32 %v685, %v678
      %v691 = vmul.f32 %v685, %v679
      %v692 = vmul.f32 %v685, %v680
      %v693 = vmul.f32 %v685, %v681
      %v694 = vadd.f32 %v632, %v686
      %v695 = vadd.f32 %v633, %v687
      %v696 = vadd.f32 %v634, %v688
      %v697 = vadd.f32 %v635, %v689
      %v698 = vadd.f32 %v636, %v690
      %v699 = vadd.f32 %v637, %v691
      %v700 = vadd.f32 %v638, %v692
      %v701 = vadd.f32 %v639, %v693
      %v702 = vlaneseq
      %v703 = vshrl.u32 %v702, 7
      %v704 = vsub.s32 3, %v703
      %v705 = vrot.slane %v326, %v704
      %v706 = vadd.f32 %v694, %v705
      %v707 = vadd.f32 %v695, %v705
      %v708 = vadd.f32 %v696, %v705
      %v709 = vadd.f32 %v697, %v705
      %v710 = vadd.f32 %v698, %v705
      %v711 = vadd.f32 %v699, %v705
      %v712 = vadd.f32 %v700, %v705
      %v713 = vadd.f32 %v701, %v705
      %v714 = vlaneseq
      %v715 = vshrl.u32 %v714, 7
      %v716 = vsub.s32 7, %v715
      %v717 = vrot.slane %v325, %v716
      %v718 = vmul.f32 %v717, %v706
      %v719 = vmul.f32 %v717, %v707
      %v720 = vmul.f32 %v717, %v708
      %v721 = vmul.f32 %v717, %v709
      %v722 = vmul.f32 %v717, %v710
      %v723 = vmul.f32 %v717, %v711
      %v724 = vmul.f32 %v717, %v712
      %v725 = vmul.f32 %v717, %v713
      %vm726 = vcmp.ge.s32.totalorder %v419, 16
      %vm727 = vcmp.ge.s32.totalorder %v420, 16
      %vm728 = vcmp.ge.s32.totalorder %v421, 16
      %vm729 = vcmp.ge.s32.totalorder %v422, 16
      %vm730 = vcmp.ge.s32.totalorder %v423, 16
      %vm731 = vcmp.ge.s32.totalorder %v424, 16
      %vm732 = vcmp.ge.s32.totalorder %v425, 16
      %vm733 = vcmp.ge.s32.totalorder %v426, 16
      %v734 = vsel %vm726, %v712, 0.0
      %v735 = vsel %vm727, %v713, 0.0
      %v736 = vsel %vm728, %v706, 0.0
      %v737 = vsel %vm729, %v707, 0.0
      %v738 = vsel %vm730, %v708, 0.0
      %v739 = vsel %vm731, %v709, 0.0
      %v740 = vsel %vm732, %v710, 0.0
      %v741 = vsel %vm733, %v711, 0.0
      %v742 = vlaneseq
      %v743 = vshrl.u32 %v742, 7
      %v744 = vsub.s32 5, %v743
      %v745 = vrot.slane %v325, %v744
      %v746 = vmul.f32 %v745, %v734
      %v747 = vmul.f32 %v745, %v735
      %v748 = vmul.f32 %v745, %v736
      %v749 = vmul.f32 %v745, %v737
      %v750 = vmul.f32 %v745, %v738
      %v751 = vmul.f32 %v745, %v739
      %v752 = vmul.f32 %v745, %v740
      %v753 = vmul.f32 %v745, %v741
      %v754 = vadd.f32 %v718, %v746
      %v755 = vadd.f32 %v719, %v747
      %v756 = vadd.f32 %v720, %v748
      %v757 = vadd.f32 %v721, %v749
      %v758 = vadd.f32 %v722, %v750
      %v759 = vadd.f32 %v723, %v751
      %v760 = vadd.f32 %v724, %v752
      %v761 = vadd.f32 %v725, %v753
      %vm762 = vcmp.ge.s32.totalorder %v419, 8
      %vm763 = vcmp.ge.s32.totalorder %v420, 8
      %vm764 = vcmp.ge.s32.totalorder %v421, 8
      %vm765 = vcmp.ge.s32.totalorder %v422, 8
      %vm766 = vcmp.ge.s32.totalorder %v423, 8
      %vm767 = vcmp.ge.s32.totalorder %v424, 8
      %vm768 = vcmp.ge.s32.totalorder %v425, 8
      %vm769 = vcmp.ge.s32.totalorder %v426, 8
      %v770 = vsel %vm762, %v713, 0.0
      %v771 = vsel %vm763, %v706, 0.0
      %v772 = vsel %vm764, %v707, 0.0
      %v773 = vsel %vm765, %v708, 0.0
      %v774 = vsel %vm766, %v709, 0.0
      %v775 = vsel %vm767, %v710, 0.0
      %v776 = vsel %vm768, %v711, 0.0
      %v777 = vsel %vm769, %v712, 0.0
      %v778 = vlaneseq
      %v779 = vshrl.u32 %v778, 7
      %v780 = vsub.s32 6, %v779
      %v781 = vrot.slane %v325, %v780
      %v782 = vmul.f32 %v781, %v770
      %v783 = vmul.f32 %v781, %v771
      %v784 = vmul.f32 %v781, %v772
      %v785 = vmul.f32 %v781, %v773
      %v786 = vmul.f32 %v781, %v774
      %v787 = vmul.f32 %v781, %v775
      %v788 = vmul.f32 %v781, %v776
      %v789 = vmul.f32 %v781, %v777
      %v790 = vadd.f32 %v754, %v782
      %v791 = vadd.f32 %v755, %v783
      %v792 = vadd.f32 %v756, %v784
      %v793 = vadd.f32 %v757, %v785
      %v794 = vadd.f32 %v758, %v786
      %v795 = vadd.f32 %v759, %v787
      %v796 = vadd.f32 %v760, %v788
      %v797 = vadd.f32 %v761, %v789
      %vm798 = vcmp.lt.s32.totalorder %v419, 56
      %vm799 = vcmp.lt.s32.totalorder %v420, 56
      %vm800 = vcmp.lt.s32.totalorder %v421, 56
      %vm801 = vcmp.lt.s32.totalorder %v422, 56
      %vm802 = vcmp.lt.s32.totalorder %v423, 56
      %vm803 = vcmp.lt.s32.totalorder %v424, 56
      %vm804 = vcmp.lt.s32.totalorder %v425, 56
      %vm805 = vcmp.lt.s32.totalorder %v426, 56
      %v806 = vsel %vm798, %v707, 0.0
      %v807 = vsel %vm799, %v708, 0.0
      %v808 = vsel %vm800, %v709, 0.0
      %v809 = vsel %vm801, %v710, 0.0
      %v810 = vsel %vm802, %v711, 0.0
      %v811 = vsel %vm803, %v712, 0.0
      %v812 = vsel %vm804, %v713, 0.0
      %v813 = vsel %vm805, %v706, 0.0
      %v814 = vlaneseq
      %v815 = vshrl.u32 %v814, 7
      %v816 = vsub.s32 0, %v815
      %v817 = vrot.slane %v326, %v816
      %v818 = vmul.f32 %v817, %v806
      %v819 = vmul.f32 %v817, %v807
      %v820 = vmul.f32 %v817, %v808
      %v821 = vmul.f32 %v817, %v809
      %v822 = vmul.f32 %v817, %v810
      %v823 = vmul.f32 %v817, %v811
      %v824 = vmul.f32 %v817, %v812
      %v825 = vmul.f32 %v817, %v813
      %v826 = vadd.f32 %v790, %v818
      %v827 = vadd.f32 %v791, %v819
      %v828 = vadd.f32 %v792, %v820
      %v829 = vadd.f32 %v793, %v821
      %v830 = vadd.f32 %v794, %v822
      %v831 = vadd.f32 %v795, %v823
      %v832 = vadd.f32 %v796, %v824
      %v833 = vadd.f32 %v797, %v825
      %vm834 = vcmp.lt.s32.totalorder %v419, 48
      %vm835 = vcmp.lt.s32.totalorder %v420, 48
      %vm836 = vcmp.lt.s32.totalorder %v421, 48
      %vm837 = vcmp.lt.s32.totalorder %v422, 48
      %vm838 = vcmp.lt.s32.totalorder %v423, 48
      %vm839 = vcmp.lt.s32.totalorder %v424, 48
      %vm840 = vcmp.lt.s32.totalorder %v425, 48
      %vm841 = vcmp.lt.s32.totalorder %v426, 48
      %v842 = vsel %vm834, %v708, 0.0
      %v843 = vsel %vm835, %v709, 0.0
      %v844 = vsel %vm836, %v710, 0.0
      %v845 = vsel %vm837, %v711, 0.0
      %v846 = vsel %vm838, %v712, 0.0
      %v847 = vsel %vm839, %v713, 0.0
      %v848 = vsel %vm840, %v706, 0.0
      %v849 = vsel %vm841, %v707, 0.0
      %v850 = vlaneseq
      %v851 = vshrl.u32 %v850, 7
      %v852 = vsub.s32 1, %v851
      %v853 = vrot.slane %v326, %v852
      %v854 = vmul.f32 %v853, %v842
      %v855 = vmul.f32 %v853, %v843
      %v856 = vmul.f32 %v853, %v844
      %v857 = vmul.f32 %v853, %v845
      %v858 = vmul.f32 %v853, %v846
      %v859 = vmul.f32 %v853, %v847
      %v860 = vmul.f32 %v853, %v848
      %v861 = vmul.f32 %v853, %v849
      %v862 = vadd.f32 %v826, %v854
      %v863 = vadd.f32 %v827, %v855
      %v864 = vadd.f32 %v828, %v856
      %v865 = vadd.f32 %v829, %v857
      %v866 = vadd.f32 %v830, %v858
      %v867 = vadd.f32 %v831, %v859
      %v868 = vadd.f32 %v832, %v860
      %v869 = vadd.f32 %v833, %v861
      %v870 = vlaneseq
      %v871 = vshrl.u32 %v870, 7
      %v872 = vsub.s32 4, %v871
      %v873 = vrot.slane %v326, %v872
      %v874 = vadd.f32 %v862, %v873
      %v875 = vadd.f32 %v863, %v873
      %v876 = vadd.f32 %v864, %v873
      %v877 = vadd.f32 %v865, %v873
      %v878 = vadd.f32 %v866, %v873
      %v879 = vadd.f32 %v867, %v873
      %v880 = vadd.f32 %v868, %v873
      %v881 = vadd.f32 %v869, %v873
      %v882 = vsub.f32 0.0, %v874
      %v883 = vsub.f32 0.0, %v875
      %v884 = vsub.f32 0.0, %v876
      %v885 = vsub.f32 0.0, %v877
      %v886 = vsub.f32 0.0, %v878
      %v887 = vsub.f32 0.0, %v879
      %v888 = vsub.f32 0.0, %v880
      %v889 = vsub.f32 0.0, %v881
      %v890 = vmul.f32 %v882, 1.442695
      %v891 = vpow.pop %v890
      %v892 = vmul.f32 %v883, 1.442695
      %v893 = vpow.pop %v892
      %v894 = vmul.f32 %v884, 1.442695
      %v895 = vpow.pop %v894
      %v896 = vmul.f32 %v885, 1.442695
      %v897 = vpow.pop %v896
      %v898 = vmul.f32 %v886, 1.442695
      %v899 = vpow.pop %v898
      %v900 = vmul.f32 %v887, 1.442695
      %v901 = vpow.pop %v900
      %v902 = vmul.f32 %v888, 1.442695
      %v903 = vpow.pop %v902
      %v904 = vmul.f32 %v889, 1.442695
      %v905 = vpow.pop %v904
      %v906 = vadd.f32 %v891, 1.0
      %v907 = vadd.f32 %v893, 1.0
      %v908 = vadd.f32 %v895, 1.0
      %v909 = vadd.f32 %v897, 1.0
      %v910 = vadd.f32 %v899, 1.0
      %v911 = vadd.f32 %v901, 1.0
      %v912 = vadd.f32 %v903, 1.0
      %v913 = vadd.f32 %v905, 1.0
      %v914 = vrcp.pop %v906
      %v915 = vrcp.pop %v907
      %v916 = vrcp.pop %v908
      %v917 = vrcp.pop %v909
      %v918 = vrcp.pop %v910
      %v919 = vrcp.pop %v911
      %v920 = vrcp.pop %v912
      %v921 = vrcp.pop %v913
      %vm922 = vcmask 64512
      %923 = vst.msk [vmem:[%s224] sm:$0xff] %vm922, %v914
      %924 = vst.msk [vmem:[%s224 + $0x8] sm:$0xff] %vm922, %v915
      %925 = vst.msk [vmem:[%s224 + $0x10] sm:$0xff] %vm922, %v916
      %926 = vst.msk [vmem:[%s224 + $0x18] sm:$0xff] %vm922, %v917
      %927 = vst.msk [vmem:[%s224 + $0x20] sm:$0xff] %vm922, %v918
      %928 = vst.msk [vmem:[%s224 + $0x28] sm:$0xff] %vm922, %v919
      %929 = vst.msk [vmem:[%s224 + $0x30] sm:$0xff] %vm922, %v920
      %930 = vst.msk [vmem:[%s224 + $0x38] sm:$0xff] %vm922, %v921
      %p931 = scmp.lt.s32.totalorder %s18, 1
      %s932 = scalar_select %p931, %s18, 1
      %p933 = scmp.lt.s32.totalorder %s19, 0
      %s934 = scalar_select %p933, %s19, 0
      %s935 = smul.addr %s932, 8
      %s936 = sadd.s32 %s934, %s935
      %s937 = smul.addr %s936, 8
      %s938 = scalar_lea.vmem %s3, %s937
      // Predicated region
      $region33: #{tpu_custom_call.1} parent=31 // pred_check
        %p939 = pneg %p124
      $region34: #{tpu_custom_call.1} parent=31 // pred_check_branch
        %941 = sbr.rel (%p939) target = $region36
      $region35: #{tpu_custom_call.1} parent=31 // pred_region
        _
      $region36: #{tpu_custom_call.1} parent=31 // pred_fallthru
        _
    $region32: #{tpu_custom_call.1} parent=5 // pred_fallthru
      _
    %p942 = scmp.le.s32.totalorder 2, %s9
    // Predicated region
    $region37: #{tpu_custom_call.1} parent=5 // pred_check
      %p943 = pneg %p942
    $region38: #{tpu_custom_call.1} parent=5 // pred_check_branch
      %945 = sbr.rel (%p943) target = $region40
    $region39: #{tpu_custom_call.1} parent=5 // pred_region
      %s946 = ssub.s32 %s9, 2
      // Predicated region
      $region41: #{tpu_custom_call.1} parent=39 // pred_check
        %p947 = pneg %p130
      $region42: #{tpu_custom_call.1} parent=39 // pred_check_branch
        %949 = sbr.rel (%p947) target = $region44
      $region43: #{tpu_custom_call.1} parent=39 // pred_region
        %p950 = scmp.lt.s32.totalorder %s20, 1
        %s951 = scalar_select %p950, %s20, 1
        %p952 = scmp.lt.s32.totalorder %s21, 0
        %s953 = scalar_select %p952, %s21, 0
        %s954 = smul.addr %s951, 8
        %s955 = sadd.s32 %s953, %s954
        %s956 = smul.addr %s955, 8
        %s957 = scalar_lea.vmem %s3, %s956
      $region44: #{tpu_custom_call.1} parent=39 // pred_fallthru
        _
    $region40: #{tpu_custom_call.1} parent=5 // pred_fallthru
      _
  $region6: #{tpu_custom_call.1} parent=0 // loop_footer
    %s13 = sadd.s32 1, %s9
  $region7: #{tpu_custom_call.1} parent=0 // loop_footer_branch
    %8 = sbr.rel target = $region3
  $region8: #{tpu_custom_call.1} parent=0 // loop_exit
    _

</llo_original>
